<compile_context>
chip_gen: v5e
topology: v5e:2x2
jax: 0.10.0
libtpu: 0.0.40
codegen_flags: <defaults>
</compile_context>

<pallas_src>
import functools
import numpy as np
import jax
import jax.numpy as jnp
from jax.experimental import pallas as pl
from jax.experimental.pallas import tpu as pltpu

SQRT_HALF = np.sqrt(0.5).astype(np.float32)


def _vmem_limit_bytes():
    """Per-generation VMEM limit with >=25% headroom (v7x: 64 MiB physical)."""
    cap = None
    try:
        info = pltpu.get_tpu_info()
        cap = getattr(info, "vmem_capacity_bytes", None)
    except Exception:
        cap = None
    if not cap:
        cap = 64 * 1024 * 1024
    return int(cap) * 3 // 4


def _conv_block_kernel(x_ref, wf_ref, bias_ref, o_ref, rhs_ref, *,
                       K, T, C, pad_left):
    """One grid step = one batch element (NCT layout throughout).

    x_ref:    (1, C, T)    f32   original (unpadded) input tile
    wf_ref:   (2C, K*C)    bf16  weight-normalized conv weight, tap-major
    bias_ref: (1, 2C, 1)   f32   fused bias (conv bias + softsign speaker)
    o_ref:    (1, C, T)    f32   output tile
    rhs_ref:  (K*C, T)     bf16  VMEM scratch: im2col operand
    """
    # ---- build the im2col operand in VMEM (in-kernel zero padding + cast) --
    # Tap k occupies rows [k*C, (k+1)*C); column t holds x[:, t + k - pad_left]
    # (zero where that index falls outside [0, T)).
    for k in range(K):
        s = k - pad_left
        lo = max(0, -s)          # first valid output column for this tap
        hi = min(T, T - s)       # one past the last valid output column
        if lo > 0:
            rhs_ref[k * C:(k + 1) * C, 0:lo] = jnp.zeros((C, lo), jnp.bfloat16)
        if hi < T:
            rhs_ref[k * C:(k + 1) * C, hi:T] = jnp.zeros((C, T - hi),
                                                         jnp.bfloat16)
        rhs_ref[k * C:(k + 1) * C, lo:hi] = (
            x_ref[0, :, lo + s:hi + s].astype(jnp.bfloat16))

    # ---- one long-contraction MXU matmul: (2C, K*C) @ (K*C, T), f32 acc ----
    acc = jnp.dot(wf_ref[...], rhs_ref[...],
                  preferred_element_type=jnp.float32)          # (2C, T) f32
    acc = acc + bias_ref[0]                                    # (2C, 1) bcast

    # ---- GLU + residual (f32; residual straight from the f32 input) -------
    values = acc[:C, :]
    gates = acc[C:, :]
    out = values * jax.nn.sigmoid(gates) + x_ref[0]
    o_ref[0] = (out * SQRT_HALF).astype(o_ref.dtype)


def conv_block_forward(x_nct, speaker_embedding, params, *, kernel_size,
                       causal_padding=False, out_dtype=jnp.float32):
    """Pallas implementation of ConvBlock.forward.

    x_nct:             (B, hidden_dim, T)  -- PyTorch NCT layout
    speaker_embedding: (B, speaker_embedding_dim)
    returns:           (B, hidden_dim, T)
    """
    w_conv, b_conv, w_sp, b_sp = (params["w_conv"], params["b_conv"],
                                  params["w_sp"], params["b_sp"])
    B, C, T = x_nct.shape
    K = kernel_size
    assert K % 2 == 1, "Kernel size must be odd (matches the PyTorch module)."
    assert T >= K, "T must be at least the kernel size."

    pad_left = (K - 1) if causal_padding else (K - 1) // 2

    # --- weight-side glue only (tiny; the activation tensor is untouched) ---
    # (2C, C, K) -> (2C, K, C) -> (2C, K*C): matches the im2col tap ordering.
    w_flat = jnp.reshape(jnp.transpose(w_conv, (0, 2, 1)),
                         (2 * C, K * C)).astype(jnp.bfloat16)

    # Speaker projection + softsign, hoisted and fused with the conv bias.
    sp = (speaker_embedding.astype(jnp.float32)
          @ w_sp.T.astype(jnp.float32)) + b_sp.astype(jnp.float32)   # (B, C)
    sp = sp / (1.0 + jnp.abs(sp))
    bias = jnp.concatenate(
        [b_conv[:C][None, :].astype(jnp.float32) + sp,
         jnp.broadcast_to(b_conv[C:][None, :].astype(jnp.float32), (B, C))],
        axis=1)                                                      # (B, 2C)
    bias = bias[:, :, None]                                          # (B, 2C, 1)

    kernel = functools.partial(_conv_block_kernel,
                               K=K, T=T, C=C, pad_left=pad_left)

    return pl.pallas_call(
        kernel,
        out_shape=jax.ShapeDtypeStruct((B, C, T), out_dtype),
        grid_spec=pltpu.PrefetchScalarGridSpec(
            num_scalar_prefetch=0,
            grid=(B,),
            in_specs=[
                pl.BlockSpec((1, C, T), lambda b: (b, 0, 0)),       # x (f32 NCT)
                pl.BlockSpec((2 * C, K * C), lambda b: (0, 0)),     # conv W (bf16)
                pl.BlockSpec((1, 2 * C, 1), lambda b: (b, 0, 0)),   # fused bias
            ],
            out_specs=pl.BlockSpec((1, C, T), lambda b: (b, 0, 0)),
            scratch_shapes=[pltpu.VMEM((K * C, T), jnp.bfloat16)],  # im2col rhs
        ),
        compiler_params=pltpu.CompilerParams(
            dimension_semantics=("parallel",),      # >=2 steps -> both v7x TCs
            vmem_limit_bytes=_vmem_limit_bytes(),   # per-generation budget
        ),
    )(x_nct.astype(jnp.float32), w_flat, bias)


# ---------------------------------------------------------------------------
# Deterministic parameter construction (mimics weight_norm'd Conv1d / Linear)
# ---------------------------------------------------------------------------
def make_params(key, kernel_size, hidden_dim, speaker_embedding_dim):
    C, K, S = hidden_dim, kernel_size, speaker_embedding_dim
    k1, k2, k3, k4, k5, k6 = jax.random.split(key, 6)

    # Conv1d(C, 2C, K) with weight_norm (dim=0): w = g * v / ||v||_(in,k)
    v_conv = jax.random.normal(k1, (2 * C, C, K), jnp.float32) * 0.1
    g_conv = 1.0 + 0.05 * jax.random.normal(k2, (2 * C,), jnp.float32)
    norm_c = jnp.sqrt(jnp.sum(v_conv ** 2, axis=(1, 2), keepdims=True)) + 1e-12
    w_conv = g_conv[:, None, None] * v_conv / norm_c
    b_conv = 0.05 * jax.random.normal(k3, (2 * C,), jnp.float32)

    # Linear(S, C) with weight_norm (dim=0): w = g * v / ||v||_row
    v_sp = jax.random.normal(k4, (C, S), jnp.float32) * 0.1
    g_sp = 1.0 + 0.05 * jax.random.normal(k5, (C,), jnp.float32)
    norm_s = jnp.sqrt(jnp.sum(v_sp ** 2, axis=1, keepdims=True)) + 1e-12
    w_sp = g_sp[:, None] * v_sp / norm_s
    b_sp = 0.05 * jax.random.normal(k6, (C,), jnp.float32)

    return {"w_conv": w_conv, "b_conv": b_conv, "w_sp": w_sp, "b_sp": b_sp}


# ---------------------------------------------------------------------------
# Pure-JAX f32 reference (mirrors the PyTorch forward, eval-mode dropout)
# ---------------------------------------------------------------------------
def reference_forward(x_nct, se, params, *, kernel_size, causal_padding=False):
    w_conv, b_conv, w_sp, b_sp = (params["w_conv"], params["b_conv"],
                                  params["w_sp"], params["b_sp"])
    B, C, T = x_nct.shape
    K = kernel_size
    if causal_padding:
        pad = (K - 1, 0)
    else:
        p = (K - 1) // 2
        pad = (p, p)
    xpad = jnp.pad(x_nct, ((0, 0), (0, 0), pad))
    conv = jax.lax.conv_general_dilated(
        xpad, w_conv, window_strides=(1,), padding="VALID",
        dimension_numbers=("NCH", "OIH", "NCH")) + b_conv[None, :, None]
    values, gates = conv[:, :C, :], conv[:, C:, :]
    sp = se @ w_sp.T + b_sp
    sp = sp / (1.0 + jnp.abs(sp))
    out = (values + sp[:, :, None]) * jax.nn.sigmoid(gates) + x_nct
    return out * SQRT_HALF


if __name__ == "__main__":
    B, hidden_dim, T = 2, 32, 16
    kernel_size = 5
    speaker_embedding_dim = 16

    key = jax.random.PRNGKey(0)
    kx, ks, kp = jax.random.split(key, 3)
    x = jax.random.normal(kx, (B, hidden_dim, T), jnp.float32)          # (B, C, T)
    speaker_embedding = jax.random.normal(
        ks, (B, speaker_embedding_dim), jnp.float32)                    # (B, S)
    params = make_params(kp, kernel_size, hidden_dim, speaker_embedding_dim)

    # bf16 MXU operands vs f32 reference -> loosened tolerance (~1e-2 relative).
    for causal in (False, True):
        out = conv_block_forward(x, speaker_embedding, params,
                                 kernel_size=kernel_size,
                                 causal_padding=causal)
        out = jax.block_until_ready(out)
        ref = reference_forward(x, speaker_embedding, params,
                                kernel_size=kernel_size,
                                causal_padding=causal)
        np.testing.assert_allclose(np.asarray(out), np.asarray(ref),
                                   rtol=2e-2, atol=2e-2)

    print("KERNEL_OK")
</pallas_src>

<mosaic_0001>
module attributes {stable_mosaic.version = 11 : i64} {
  func.func @_conv_block_kernel(%arg0: i32, %arg1: memref<1x32x16xf32, #tpu.memory_space<vmem>>, %arg2: memref<64x160xbf16, #tpu.memory_space<vmem>>, %arg3: memref<1x64x1xf32, #tpu.memory_space<vmem>>, %arg4: memref<1x32x16xf32, #tpu.memory_space<vmem>>, %arg5: memref<160x16xbf16, #tpu.memory_space<vmem>>) attributes {dimension_semantics = [#tpu.dimension_semantics<parallel>], iteration_bounds = array<i64: 2>, scalar_prefetch = 0 : i64, scratch_operands = 1 : i64, tpu.core_type = #tpu.core_type<tc>, window_params = [{transform_indices = @transform_0, window_bounds = array<i64: 1, 32, 16>}, {pipeline_mode = #tpu.pipeline_mode<synchronous>, transform_indices = @transform_1, window_bounds = array<i64: 64, 160>}, {transform_indices = @transform_2, window_bounds = array<i64: 1, 64, 1>}, {transform_indices = @transform_3, window_bounds = array<i64: 1, 32, 16>}]} {
    %cst = arith.constant 0.000000e+00 : bf16
    %0 = vector.broadcast %cst : bf16 to vector<32x2xbf16>
    %c0 = arith.constant 0 : index
    %c0_0 = arith.constant 0 : index
    %1 = vector.load %arg5[%c0, %c0_0] : memref<160x16xbf16, #tpu.memory_space<vmem>>, vector<32x2xbf16>
    tpu.vector_store %arg5[%c0, %c0_0], %0 {strides = array<i32>} : memref<160x16xbf16, #tpu.memory_space<vmem>>, vector<32x2xbf16>,
    %c0_1 = arith.constant 0 : index
    %c0_2 = arith.constant 0 : index
    %c0_3 = arith.constant 0 : index
    %2 = vector.load %arg1[%c0_1, %c0_2, %c0_3] : memref<1x32x16xf32, #tpu.memory_space<vmem>>, vector<1x32x14xf32>
    %3 = vector.shape_cast %2 : vector<1x32x14xf32> to vector<32x14xf32>
    %4 = arith.truncf %3 : vector<32x14xf32> to vector<32x14xbf16>
    %c0_4 = arith.constant 0 : index
    %c2 = arith.constant 2 : index
    %5 = vector.load %arg5[%c0_4, %c2] : memref<160x16xbf16, #tpu.memory_space<vmem>>, vector<32x14xbf16>
    tpu.vector_store %arg5[%c0_4, %c2], %4 {strides = array<i32>} : memref<160x16xbf16, #tpu.memory_space<vmem>>, vector<32x14xbf16>,
    %cst_5 = arith.constant 0.000000e+00 : bf16
    %6 = vector.broadcast %cst_5 : bf16 to vector<32x1xbf16>
    %c32 = arith.constant 32 : index
    %c0_6 = arith.constant 0 : index
    %7 = vector.load %arg5[%c32, %c0_6] : memref<160x16xbf16, #tpu.memory_space<vmem>>, vector<32x1xbf16>
    tpu.vector_store %arg5[%c32, %c0_6], %6 {strides = array<i32>} : memref<160x16xbf16, #tpu.memory_space<vmem>>, vector<32x1xbf16>,
    %c0_7 = arith.constant 0 : index
    %c0_8 = arith.constant 0 : index
    %c0_9 = arith.constant 0 : index
    %8 = vector.load %arg1[%c0_7, %c0_8, %c0_9] : memref<1x32x16xf32, #tpu.memory_space<vmem>>, vector<1x32x15xf32>
    %9 = vector.shape_cast %8 : vector<1x32x15xf32> to vector<32x15xf32>
    %10 = arith.truncf %9 : vector<32x15xf32> to vector<32x15xbf16>
    %c32_10 = arith.constant 32 : index
    %c1 = arith.constant 1 : index
    %11 = vector.load %arg5[%c32_10, %c1] : memref<160x16xbf16, #tpu.memory_space<vmem>>, vector<32x15xbf16>
    tpu.vector_store %arg5[%c32_10, %c1], %10 {strides = array<i32>} : memref<160x16xbf16, #tpu.memory_space<vmem>>, vector<32x15xbf16>,
    %c0_11 = arith.constant 0 : index
    %c0_12 = arith.constant 0 : index
    %c0_13 = arith.constant 0 : index
    %12 = vector.load %arg1[%c0_11, %c0_12, %c0_13] : memref<1x32x16xf32, #tpu.memory_space<vmem>>, vector<1x32x16xf32>
    %13 = vector.shape_cast %12 : vector<1x32x16xf32> to vector<32x16xf32>
    %14 = arith.truncf %13 : vector<32x16xf32> to vector<32x16xbf16>
    %c64 = arith.constant 64 : index
    %c0_14 = arith.constant 0 : index
    %15 = vector.load %arg5[%c64, %c0_14] : memref<160x16xbf16, #tpu.memory_space<vmem>>, vector<32x16xbf16>
    tpu.vector_store %arg5[%c64, %c0_14], %14 {strides = array<i32>} : memref<160x16xbf16, #tpu.memory_space<vmem>>, vector<32x16xbf16>,
    %cst_15 = arith.constant 0.000000e+00 : bf16
    %16 = vector.broadcast %cst_15 : bf16 to vector<32x1xbf16>
    %c96 = arith.constant 96 : index
    %c15 = arith.constant 15 : index
    %17 = vector.load %arg5[%c96, %c15] : memref<160x16xbf16, #tpu.memory_space<vmem>>, vector<32x1xbf16>
    tpu.vector_store %arg5[%c96, %c15], %16 {strides = array<i32>} : memref<160x16xbf16, #tpu.memory_space<vmem>>, vector<32x1xbf16>,
    %c0_16 = arith.constant 0 : index
    %c0_17 = arith.constant 0 : index
    %c1_18 = arith.constant 1 : index
    %18 = vector.load %arg1[%c0_16, %c0_17, %c1_18] : memref<1x32x16xf32, #tpu.memory_space<vmem>>, vector<1x32x15xf32>
    %19 = vector.shape_cast %18 : vector<1x32x15xf32> to vector<32x15xf32>
    %20 = arith.truncf %19 : vector<32x15xf32> to vector<32x15xbf16>
    %c96_19 = arith.constant 96 : index
    %c0_20 = arith.constant 0 : index
    %21 = vector.load %arg5[%c96_19, %c0_20] : memref<160x16xbf16, #tpu.memory_space<vmem>>, vector<32x15xbf16>
    tpu.vector_store %arg5[%c96_19, %c0_20], %20 {strides = array<i32>} : memref<160x16xbf16, #tpu.memory_space<vmem>>, vector<32x15xbf16>,
    %cst_21 = arith.constant 0.000000e+00 : bf16
    %22 = vector.broadcast %cst_21 : bf16 to vector<32x2xbf16>
    %c128 = arith.constant 128 : index
    %c14 = arith.constant 14 : index
    %23 = vector.load %arg5[%c128, %c14] : memref<160x16xbf16, #tpu.memory_space<vmem>>, vector<32x2xbf16>
    tpu.vector_store %arg5[%c128, %c14], %22 {strides = array<i32>} : memref<160x16xbf16, #tpu.memory_space<vmem>>, vector<32x2xbf16>,
    %c0_22 = arith.constant 0 : index
    %c0_23 = arith.constant 0 : index
    %c2_24 = arith.constant 2 : index
    %24 = vector.load %arg1[%c0_22, %c0_23, %c2_24] : memref<1x32x16xf32, #tpu.memory_space<vmem>>, vector<1x32x14xf32>
    %25 = vector.shape_cast %24 : vector<1x32x14xf32> to vector<32x14xf32>
    %26 = arith.truncf %25 : vector<32x14xf32> to vector<32x14xbf16>
    %c128_25 = arith.constant 128 : index
    %c0_26 = arith.constant 0 : index
    %27 = vector.load %arg5[%c128_25, %c0_26] : memref<160x16xbf16, #tpu.memory_space<vmem>>, vector<32x14xbf16>
    tpu.vector_store %arg5[%c128_25, %c0_26], %26 {strides = array<i32>} : memref<160x16xbf16, #tpu.memory_space<vmem>>, vector<32x14xbf16>,
    %c0_27 = arith.constant 0 : index
    %c0_28 = arith.constant 0 : index
    %28 = vector.load %arg2[%c0_27, %c0_28] : memref<64x160xbf16, #tpu.memory_space<vmem>>, vector<64x160xbf16>
    %c0_29 = arith.constant 0 : index
    %c0_30 = arith.constant 0 : index
    %29 = vector.load %arg5[%c0_29, %c0_30] : memref<160x16xbf16, #tpu.memory_space<vmem>>, vector<160x16xbf16>
    %cst_31 = arith.constant dense<0.000000e+00> : vector<64x16xf32>
    %30 = tpu.matmul %28, %29, %cst_31 {dimension_numbers = #tpu.dot_dimension_numbers<[1], [0], [0], [1], [0, 0, 1, 1], [], []>} : vector<64x160xbf16>, vector<160x16xbf16>, vector<64x16xf32> -> vector<64x16xf32>
    %c0_32 = arith.constant 0 : index
    %c0_33 = arith.constant 0 : index
    %c0_34 = arith.constant 0 : index
    %31 = vector.load %arg3[%c0_32, %c0_33, %c0_34] : memref<1x64x1xf32, #tpu.memory_space<vmem>>, vector<1x64x1xf32>
    %32 = vector.shape_cast %31 : vector<1x64x1xf32> to vector<64x1xf32>
    %33 = vector.broadcast %32 : vector<64x1xf32> to vector<64x16xf32>
    %34 = arith.addf %30, %33 : vector<64x16xf32>
    %35 = vector.extract_strided_slice %34 {offsets = [0, 0], sizes = [32, 16], strides = [1, 1]} : vector<64x16xf32> to vector<32x16xf32>
    %36 = vector.extract_strided_slice %34 {offsets = [32, 0], sizes = [32, 16], strides = [1, 1]} : vector<64x16xf32> to vector<32x16xf32>
    %37 = arith.negf %36 : vector<32x16xf32>
    %38 = math.exp %37 : vector<32x16xf32>
    %cst_35 = arith.constant 1.000000e+00 : f32
    %39 = vector.broadcast %cst_35 : f32 to vector<32x16xf32>
    %40 = arith.addf %39, %38 : vector<32x16xf32>
    %41 = arith.divf %39, %40 : vector<32x16xf32>
    %42 = arith.mulf %35, %41 : vector<32x16xf32>
    %c0_36 = arith.constant 0 : index
    %c0_37 = arith.constant 0 : index
    %c0_38 = arith.constant 0 : index
    %43 = vector.load %arg1[%c0_36, %c0_37, %c0_38] : memref<1x32x16xf32, #tpu.memory_space<vmem>>, vector<1x32x16xf32>
    %44 = vector.shape_cast %43 : vector<1x32x16xf32> to vector<32x16xf32>
    %45 = arith.addf %42, %44 : vector<32x16xf32>
    %cst_39 = arith.constant 0.707106769 : f32
    %46 = vector.broadcast %cst_39 : f32 to vector<32x16xf32>
    %47 = arith.mulf %45, %46 : vector<32x16xf32>
    %c0_40 = arith.constant 0 : index
    %c0_41 = arith.constant 0 : index
    %c0_42 = arith.constant 0 : index
    %48 = vector.load %arg4[%c0_40, %c0_41, %c0_42] : memref<1x32x16xf32, #tpu.memory_space<vmem>>, vector<1x32x16xf32>
    %49 = vector.shape_cast %48 : vector<1x32x16xf32> to vector<32x16xf32>
    %50 = vector.shape_cast %47 : vector<32x16xf32> to vector<1x32x16xf32>
    tpu.vector_store %arg4[%c0_40, %c0_41, %c0_42], %50 {strides = array<i32>} : memref<1x32x16xf32, #tpu.memory_space<vmem>>, vector<1x32x16xf32>,
    return
  }
  func.func @transform_0(%arg0: i32) -> (i32, i32, i32) {
    %c0_i32 = arith.constant 0 : i32
    %c0_i32_0 = arith.constant 0 : i32
    %c0_i32_1 = arith.constant 0 : i32
    return %arg0, %c0_i32, %c0_i32_0 : i32, i32, i32
  }
  func.func @transform_1(%arg0: i32) -> (i32, i32) {
    %c0_i32 = arith.constant 0 : i32
    %c0_i32_0 = arith.constant 0 : i32
    %c0_i32_1 = arith.constant 0 : i32
    return %c0_i32, %c0_i32_0 : i32, i32
  }
  func.func @transform_2(%arg0: i32) -> (i32, i32, i32) {
    %c0_i32 = arith.constant 0 : i32
    %c0_i32_0 = arith.constant 0 : i32
    %c0_i32_1 = arith.constant 0 : i32
    return %arg0, %c0_i32, %c0_i32_0 : i32, i32, i32
  }
  func.func @transform_3(%arg0: i32) -> (i32, i32, i32) {
    %c0_i32 = arith.constant 0 : i32
    %c0_i32_0 = arith.constant 0 : i32
    %c0_i32_1 = arith.constant 0 : i32
    return %arg0, %c0_i32, %c0_i32_0 : i32, i32, i32
  }
}

</mosaic_0001>

<llo_original>
// kernel: tpu_custom_call.1
$region0: #{tpu_custom_call.1}
  #allocation0 [shape = 'u32[]', space=smem, size = 0x4, offset = 0x4, fixed_abs, tag = 'smem constant byte address 0x4 - core index']
  #allocation1 [shape = 'u32[72,128]{1,0:T(1,128)}', space=vmem, size = 0x9000, scoped, tag = 'internal scratch']
  #allocation2 [shape = 'bf16[160,16]{1,0:T(8,128)(2,1)}', space=vmem, size = 0xa000, scoped, tag = 'scratch operand']
  %s0 = inlined_call_operand.vmem [shape: f32[2,32,16], index: 0, kind: input, shape index: {}]
  %s1 = inlined_call_operand.vmem [shape: bf16[64,160], index: 1, kind: input, shape index: {}]
  %s2 = inlined_call_operand.vmem [shape: f32[2,64,1], index: 2, kind: input, shape index: {}]
  %s3 = inlined_call_operand.vmem [shape: f32[2,32,16], index: 3, kind: output, shape index: {}]
  %s4 = sld [smem:[#allocation0]]
  $region45: #{tpu_custom_call.1} parent=0
    _
  %s6 = ssub.s32 1, %s4
  %s7 = scalar_select 0, %s6, %s4
  loop: start=0, step=1, limit=4
  $region2: #{tpu_custom_call.1} parent=0 // loop_pre_header
    _
  $region3: #{tpu_custom_call.1} parent=0 // loop_header
    %s9 = sphi 0, %s13
    %p10 = scmp.ge.s32.totalorder %s9, 4
    %s19 = sphi 0, %s21
    %s22 = sphi 0, %s19
    %s23 = sphi 0, %s22
    %s39 = sphi 0, %s23
    %s43 = sphi 0, %s43
    %s45 = sphi 0, %s43
    %s46 = sphi 0, %s45
    %s60 = sphi 0, %s46
    %s66 = sphi 0, %s68
    %s69 = sphi 0, %s66
    %s70 = sphi 0, %s69
    %s86 = sphi 0, %s70
    %s92 = sphi 0, %s94
    %s95 = sphi 0, %s92
    %s96 = sphi 0, %s95
    %s112 = sphi 0, %s96
  $region4: #{tpu_custom_call.1} parent=0 // loop_header_branch
    %12 = sbr.rel (%p10) target = $region8
  $region5: #{tpu_custom_call.1} parent=0 // loop_body
    %s14 = ssub.s32 %s9, 1
    %s15 = ssub.s32 %s9, 2
    %s16 = sadd.s32 %s9, 1
    %s17 = ssub.s32 %s9, %s16
    %p18 = scmp.eq.s32.totalorder %s17, 0
    %s20 = sadd.s32 %s19, 1
    %s21 = scalar_select %p18, %s19, %s20
    %p24 = pneg %p18
    %p25 = scmp.eq.s32.totalorder %s9, 1
    %p26 = por %p24, %p25
    %p27 = scmp.ne.s32.totalorder %s19, %s22
    %p28 = scmp.eq.s32.totalorder %s9, 0
    %p29 = por %p27, %p28
    %p30 = scmp.ne.s32.totalorder %s19, %s22
    %p31 = scmp.eq.s32.totalorder %s14, 1
    %p32 = por %p30, %p31
    %p33 = scmp.ne.s32.totalorder %s22, %s23
    %p34 = scmp.eq.s32.totalorder %s14, 0
    %p35 = por %p33, %p34
    %p36 = scmp.ne.s32.totalorder %s22, %s23
    %p37 = scmp.eq.s32.totalorder %s15, 1
    %p38 = por %p36, %p37
    %p40 = scmp.ne.s32.totalorder %s23, %s39
    %p41 = scmp.eq.s32.totalorder %s15, 0
    %p42 = por %p40, %p41
    %s44 = sadd.s32 %s43, 1
    %p47 = scmp.eq.s32.totalorder %s9, 1
    %p48 = scmp.ne.s32.totalorder %s43, %s45
    %p49 = scmp.eq.s32.totalorder %s9, 0
    %p50 = por %p48, %p49
    %p51 = scmp.ne.s32.totalorder %s43, %s45
    %p52 = scmp.eq.s32.totalorder %s14, 1
    %p53 = por %p51, %p52
    %p54 = scmp.ne.s32.totalorder %s45, %s46
    %p55 = scmp.eq.s32.totalorder %s14, 0
    %p56 = por %p54, %p55
    %p57 = scmp.ne.s32.totalorder %s45, %s46
    %p58 = scmp.eq.s32.totalorder %s15, 1
    %p59 = por %p57, %p58
    %p61 = scmp.ne.s32.totalorder %s46, %s60
    %p62 = scmp.eq.s32.totalorder %s15, 0
    %p63 = por %p61, %p62
    %s64 = ssub.s32 %s9, %s16
    %p65 = scmp.eq.s32.totalorder %s64, 0
    %s67 = sadd.s32 %s66, 1
    %s68 = scalar_select %p65, %s66, %s67
    %p71 = pneg %p65
    %p72 = scmp.eq.s32.totalorder %s9, 1
    %p73 = por %p71, %p72
    %p74 = scmp.ne.s32.totalorder %s66, %s69
    %p75 = scmp.eq.s32.totalorder %s9, 0
    %p76 = por %p74, %p75
    %p77 = scmp.ne.s32.totalorder %s66, %s69
    %p78 = scmp.eq.s32.totalorder %s14, 1
    %p79 = por %p77, %p78
    %p80 = scmp.ne.s32.totalorder %s69, %s70
    %p81 = scmp.eq.s32.totalorder %s14, 0
    %p82 = por %p80, %p81
    %p83 = scmp.ne.s32.totalorder %s69, %s70
    %p84 = scmp.eq.s32.totalorder %s15, 1
    %p85 = por %p83, %p84
    %p87 = scmp.ne.s32.totalorder %s70, %s86
    %p88 = scmp.eq.s32.totalorder %s15, 0
    %p89 = por %p87, %p88
    %s90 = ssub.s32 %s9, %s16
    %p91 = scmp.eq.s32.totalorder %s90, 0
    %s93 = sadd.s32 %s92, 1
    %s94 = scalar_select %p91, %s92, %s93
    %p97 = pneg %p91
    %p98 = scmp.eq.s32.totalorder %s9, 1
    %p99 = por %p97, %p98
    %p100 = scmp.ne.s32.totalorder %s92, %s95
    %p101 = scmp.eq.s32.totalorder %s9, 0
    %p102 = por %p100, %p101
    %p103 = scmp.ne.s32.totalorder %s92, %s95
    %p104 = scmp.eq.s32.totalorder %s14, 1
    %p105 = por %p103, %p104
    %p106 = scmp.ne.s32.totalorder %s95, %s96
    %p107 = scmp.eq.s32.totalorder %s14, 0
    %p108 = por %p106, %p107
    %p109 = scmp.ne.s32.totalorder %s95, %s96
    %p110 = scmp.eq.s32.totalorder %s15, 1
    %p111 = por %p109, %p110
    %p113 = scmp.ne.s32.totalorder %s96, %s112
    %p114 = scmp.eq.s32.totalorder %s15, 0
    %p115 = por %p113, %p114
    %p116 = scmp.le.s32.totalorder 1, %s9
    %p117 = scmp.lt.s32.totalorder %s9, 3
    %p118 = pnand %p116, %p117
    %p119 = pneg %p118
    // Predicated region
    $region9: #{tpu_custom_call.1} parent=5 // pred_check
      _
    $region10: #{tpu_custom_call.1} parent=5 // pred_check_branch
      %121 = sbr.rel (%p118) target = $region12
    $region11: #{tpu_custom_call.1} parent=5 // pred_region
      %s122 = ssub.s32 %s9, 1
      // Predicated region
      $region13: #{tpu_custom_call.1} parent=11 // pred_check
        %p123 = pneg %p56
      $region14: #{tpu_custom_call.1} parent=11 // pred_check_branch
        %125 = sbr.rel (%p123) target = $region16
      $region15: #{tpu_custom_call.1} parent=11 // pred_region
        _
      $region16: #{tpu_custom_call.1} parent=11 // pred_fallthru
        _
    $region12: #{tpu_custom_call.1} parent=5 // pred_fallthru
      _
    %p126 = scmp.lt.s32.totalorder %s9, 2
    // Predicated region
    $region17: #{tpu_custom_call.1} parent=5 // pred_check
      %p127 = pneg %p126
    $region18: #{tpu_custom_call.1} parent=5 // pred_check_branch
      %129 = sbr.rel (%p127) target = $region20
    $region19: #{tpu_custom_call.1} parent=5 // pred_region
      // Predicated region
      $region21: #{tpu_custom_call.1} parent=19 // pred_check
        %p130 = pneg %p29
      $region22: #{tpu_custom_call.1} parent=19 // pred_check_branch
        %132 = sbr.rel (%p130) target = $region24
      $region23: #{tpu_custom_call.1} parent=19 // pred_region
        %p133 = scmp.lt.s32.totalorder %s9, 1
        %s134 = scalar_select %p133, %s9, 1
        %s135 = smul.addr %s134, 4
        %s136 = smul.addr %s135, 8
        %s137 = scalar_lea.vmem %s0, %s136
      $region24: #{tpu_custom_call.1} parent=19 // pred_fallthru
        _
      // Predicated region
      $region25: #{tpu_custom_call.1} parent=19 // pred_check
        %p138 = pneg %p76
      $region26: #{tpu_custom_call.1} parent=19 // pred_check_branch
        %140 = sbr.rel (%p138) target = $region28
      $region27: #{tpu_custom_call.1} parent=19 // pred_region
        %p141 = scmp.lt.s32.totalorder %s9, 1
        %s142 = scalar_select %p141, %s9, 1
        %s143 = smul.addr %s142, 8
        %s144 = smul.addr %s143, 8
        %s145 = scalar_lea.vmem %s2, %s144
      $region28: #{tpu_custom_call.1} parent=19 // pred_fallthru
        _
    $region20: #{tpu_custom_call.1} parent=5 // pred_fallthru
      _
    %p146 = scmp.le.s32.totalorder 1, %s9
    %p147 = scmp.lt.s32.totalorder %s9, 3
    %p148 = pnand %p146, %p147
    %p149 = pneg %p148
    // Predicated region
    $region29: #{tpu_custom_call.1} parent=5 // pred_check
      _
    $region30: #{tpu_custom_call.1} parent=5 // pred_check_branch
      %151 = sbr.rel (%p148) target = $region32
    $region31: #{tpu_custom_call.1} parent=5 // pred_region
      %s152 = ssub.s32 %s9, 1
      %p153 = scmp.lt.s32.totalorder %s14, 1
      %s154 = scalar_select %p153, %s14, 1
      %s155 = smul.addr %s154, 4
      %s156 = smul.addr %s155, 8
      %s157 = scalar_lea.vmem %s0, %s156
      %p158 = pneg %p35
      %p159 = pneg %p32
      %p160 = pneg %p56
      %p161 = pneg %p53
      %p162 = scmp.lt.s32.totalorder %s14, 1
      %s163 = scalar_select %p162, %s14, 1
      %s164 = smul.addr %s163, 8
      %s165 = smul.addr %s164, 8
      %s166 = scalar_lea.vmem %s2, %s165
      %p167 = pneg %p82
      %p168 = pneg %p79
      %p169 = pneg %p108
      %p170 = pneg %p105
      %p171 = scmp.lt.s32.totalorder %s14, 1
      %s172 = scalar_select %p171, %s14, 1
      %s173 = smul.addr %s172, 4
      %s174 = smul.addr %s173, 8
      %s175 = scalar_lea.vmem %s3, %s174
      %p176 = scmp.lt.s32.totalorder %s14, 1
      %s177 = scalar_select %p176, %s14, 1
      %s178 = smul.addr %s177, 4
      %s179 = smul.addr %s178, 8
      %s180 = scalar_lea.vmem %s0, %s179
      %p181 = scmp.lt.s32.totalorder %s14, 1
      %s182 = scalar_select %p181, %s14, 1
      %s183 = smul.addr %s182, 8
      %s184 = smul.addr %s183, 8
      %s185 = scalar_lea.vmem %s2, %s184
      %p186 = scmp.lt.s32.totalorder %s14, 1
      %s187 = scalar_select %p186, %s14, 1
      %s188 = smul.addr %s187, 4
      %s189 = smul.addr %s188, 8
      %s190 = scalar_lea.vmem %s3, %s189
      %vm192 = vcmask 11264
      %193 = vst.msk [vmem:[#allocation2] sm:$0xf] %vm192, 0
      %194 = vst.msk [vmem:[#allocation2 + $0x4] sm:$0xf] %vm192, 0
      %195 = vst.msk [vmem:[#allocation2 + $0x8] sm:$0xf] %vm192, 0
      %196 = vst.msk [vmem:[#allocation2 + $0xc] sm:$0xf] %vm192, 0
      %v197 = vld [vmem:[%s180] sm:$0xff]
      %v198 = vld [vmem:[%s180 + $0x8] sm:$0xff]
      %v199 = vld [vmem:[%s180 + $0x10] sm:$0xff]
      %v200 = vld [vmem:[%s180 + $0x18] sm:$0xff]
      %v201 = vpack.c.bf16 %v197, %v197
      %v202 = vpack.c.bf16 %v198, %v198
      %v203 = vpack.c.bf16 %v199, %v199
      %v204 = vpack.c.bf16 %v200, %v200
      %209 = vrot.lane.b32.xlu0 %v201, 2
      %v210 = vpop.permute.xlu0 %209
      %211 = vrot.lane.b32.xlu0 %v202, 2
      %v212 = vpop.permute.xlu0 %211
      %213 = vrot.lane.b32.xlu0 %v203, 2
      %v214 = vpop.permute.xlu0 %213
      %215 = vrot.lane.b32.xlu0 %v204, 2
      %v216 = vpop.permute.xlu0 %215
      %vm221 = vcmask 125968
      %222 = vst.msk [vmem:[#allocation2] sm:$0xf] %vm221, %v210
      %223 = vst.msk [vmem:[#allocation2 + $0x4] sm:$0xf] %vm221, %v212
      %224 = vst.msk [vmem:[#allocation2 + $0x8] sm:$0xf] %vm221, %v214
      %225 = vst.msk [vmem:[#allocation2 + $0xc] sm:$0xf] %vm221, %v216
      %vm226 = vcmask 3072
      %227 = vst.msk [vmem:[#allocation2 + $0x10] sm:$0xf] %vm226, 0
      %228 = vst.msk [vmem:[#allocation2 + $0x14] sm:$0xf] %vm226, 0
      %229 = vst.msk [vmem:[#allocation2 + $0x18] sm:$0xf] %vm226, 0
      %230 = vst.msk [vmem:[#allocation2 + $0x1c] sm:$0xf] %vm226, 0
      %v231 = vld [vmem:[%s180] sm:$0xff]
      %v232 = vld [vmem:[%s180 + $0x8] sm:$0xff]
      %v233 = vld [vmem:[%s180 + $0x10] sm:$0xff]
      %v234 = vld [vmem:[%s180 + $0x18] sm:$0xff]
      %v235 = vpack.c.bf16 %v231, %v231
      %v236 = vpack.c.bf16 %v232, %v232
      %v237 = vpack.c.bf16 %v233, %v233
      %v238 = vpack.c.bf16 %v234, %v234
      %243 = vrot.lane.b32.xlu0 %v235, 1
      %v244 = vpop.permute.xlu0 %243
      %245 = vrot.lane.b32.xlu0 %v236, 1
      %v246 = vpop.permute.xlu0 %245
      %247 = vrot.lane.b32.xlu0 %v237, 1
      %v248 = vpop.permute.xlu0 %247
      %249 = vrot.lane.b32.xlu0 %v238, 1
      %v250 = vpop.permute.xlu0 %249
      %vm255 = vcmask 125960
      %256 = vst.msk [vmem:[#allocation2 + $0x10] sm:$0xf] %vm255, %v244
      %257 = vst.msk [vmem:[#allocation2 + $0x14] sm:$0xf] %vm255, %v246
      %258 = vst.msk [vmem:[#allocation2 + $0x18] sm:$0xf] %vm255, %v248
      %259 = vst.msk [vmem:[#allocation2 + $0x1c] sm:$0xf] %vm255, %v250
      %v260 = vld [vmem:[%s180] sm:$0xff]
      %v261 = vld [vmem:[%s180 + $0x8] sm:$0xff]
      %v262 = vld [vmem:[%s180 + $0x10] sm:$0xff]
      %v263 = vld [vmem:[%s180 + $0x18] sm:$0xff]
      %v264 = vpack.c.bf16 %v260, %v260
      %v265 = vpack.c.bf16 %v261, %v261
      %v266 = vpack.c.bf16 %v262, %v262
      %v267 = vpack.c.bf16 %v263, %v263
      %vm268 = vcmask 125952
      %269 = vst.msk [vmem:[#allocation2 + $0x20] sm:$0xf] %vm268, %v264
      %270 = vst.msk [vmem:[#allocation2 + $0x24] sm:$0xf] %vm268, %v265
      %271 = vst.msk [vmem:[#allocation2 + $0x28] sm:$0xf] %vm268, %v266
      %272 = vst.msk [vmem:[#allocation2 + $0x2c] sm:$0xf] %vm268, %v267
      %vm273 = vcmask 126072
      %274 = vst.msk [vmem:[#allocation2 + $0x30] sm:$0xf] %vm273, 0
      %275 = vst.msk [vmem:[#allocation2 + $0x34] sm:$0xf] %vm273, 0
      %276 = vst.msk [vmem:[#allocation2 + $0x38] sm:$0xf] %vm273, 0
      %277 = vst.msk [vmem:[#allocation2 + $0x3c] sm:$0xf] %vm273, 0
      %v278 = vld [vmem:[%s180] sm:$0xff]
      %v279 = vld [vmem:[%s180 + $0x8] sm:$0xff]
      %v280 = vld [vmem:[%s180 + $0x10] sm:$0xff]
      %v281 = vld [vmem:[%s180 + $0x18] sm:$0xff]
      %v282 = vpack.c.bf16 %v278, %v278
      %v283 = vpack.c.bf16 %v279, %v279
      %v284 = vpack.c.bf16 %v280, %v280
      %v285 = vpack.c.bf16 %v281, %v281
      %290 = vrot.lane.b32.xlu0 %v282, 127
      %v291 = vpop.permute.xlu0 %290
      %292 = vrot.lane.b32.xlu0 %v283, 127
      %v293 = vpop.permute.xlu0 %292
      %294 = vrot.lane.b32.xlu0 %v284, 127
      %v295 = vpop.permute.xlu0 %294
      %296 = vrot.lane.b32.xlu0 %v285, 127
      %v297 = vpop.permute.xlu0 %296
      %vm302 = vcmask 117760
      %303 = vst.msk [vmem:[#allocation2 + $0x30] sm:$0xf] %vm302, %v291
      %304 = vst.msk [vmem:[#allocation2 + $0x34] sm:$0xf] %vm302, %v293
      %305 = vst.msk [vmem:[#allocation2 + $0x38] sm:$0xf] %vm302, %v295
      %306 = vst.msk [vmem:[#allocation2 + $0x3c] sm:$0xf] %vm302, %v297
      %vm307 = vcmask 126064
      %308 = vst.msk [vmem:[#allocation2 + $0x40] sm:$0xf] %vm307, 0
      %309 = vst.msk [vmem:[#allocation2 + $0x44] sm:$0xf] %vm307, 0
      %310 = vst.msk [vmem:[#allocation2 + $0x48] sm:$0xf] %vm307, 0
      %311 = vst.msk [vmem:[#allocation2 + $0x4c] sm:$0xf] %vm307, 0
      %v312 = vld [vmem:[%s180] sm:$0xff]
      %v313 = vld [vmem:[%s180 + $0x8] sm:$0xff]
      %v314 = vld [vmem:[%s180 + $0x10] sm:$0xff]
      %v315 = vld [vmem:[%s180 + $0x18] sm:$0xff]
      %v316 = vpack.c.bf16 %v312, %v312
      %v317 = vpack.c.bf16 %v313, %v313
      %v318 = vpack.c.bf16 %v314, %v314
      %v319 = vpack.c.bf16 %v315, %v315
      %324 = vrot.lane.b32.xlu0 %v316, 126
      %v325 = vpop.permute.xlu0 %324
      %326 = vrot.lane.b32.xlu0 %v317, 126
      %v327 = vpop.permute.xlu0 %326
      %328 = vrot.lane.b32.xlu0 %v318, 126
      %v329 = vpop.permute.xlu0 %328
      %330 = vrot.lane.b32.xlu0 %v319, 126
      %v331 = vpop.permute.xlu0 %330
      %vm336 = vcmask 109568
      %337 = vst.msk [vmem:[#allocation2 + $0x40] sm:$0xf] %vm336, %v325
      %338 = vst.msk [vmem:[#allocation2 + $0x44] sm:$0xf] %vm336, %v327
      %339 = vst.msk [vmem:[#allocation2 + $0x48] sm:$0xf] %vm336, %v329
      %340 = vst.msk [vmem:[#allocation2 + $0x4c] sm:$0xf] %vm336, %v331
      %v341 = vld [vmem:[%s1] sm:$0xff]
      %v342 = vld [vmem:[%s1 + $0x8] sm:$0xff]
      %v343 = vld [vmem:[%s1 + $0x10] sm:$0xff]
      %v344 = vld [vmem:[%s1 + $0x18] sm:$0xff]
      %v345 = vld [vmem:[%s1 + $0x20] sm:$0xff]
      %v346 = vld [vmem:[%s1 + $0x28] sm:$0xff]
      %v347 = vld [vmem:[%s1 + $0x30] sm:$0xff]
      %v348 = vld [vmem:[%s1 + $0x38] sm:$0xff]
      %v349 = vld [vmem:[#allocation2] sm:$0xf]
      %v350 = vld [vmem:[#allocation2 + $0x4] sm:$0xf]
      %v351 = vld [vmem:[#allocation2 + $0x8] sm:$0xf]
      %v352 = vld [vmem:[#allocation2 + $0xc] sm:$0xf]
      %v353 = vld [vmem:[#allocation2 + $0x10] sm:$0xf]
      %v354 = vld [vmem:[#allocation2 + $0x14] sm:$0xf]
      %v355 = vld [vmem:[#allocation2 + $0x18] sm:$0xf]
      %v356 = vld [vmem:[#allocation2 + $0x1c] sm:$0xf]
      %v357 = vld [vmem:[#allocation2 + $0x20] sm:$0xf]
      %v358 = vld [vmem:[#allocation2 + $0x24] sm:$0xf]
      %v359 = vld [vmem:[#allocation2 + $0x28] sm:$0xf]
      %v360 = vld [vmem:[#allocation2 + $0x2c] sm:$0xf]
      %v361 = vld [vmem:[#allocation2 + $0x30] sm:$0xf]
      %v362 = vld [vmem:[#allocation2 + $0x34] sm:$0xf]
      %v363 = vld [vmem:[#allocation2 + $0x38] sm:$0xf]
      %v364 = vld [vmem:[#allocation2 + $0x3c] sm:$0xf]
      %v365 = vld [vmem:[#allocation2 + $0x40] sm:$0xf]
      %v366 = vld [vmem:[#allocation2 + $0x44] sm:$0xf]
      %v367 = vld [vmem:[#allocation2 + $0x48] sm:$0xf]
      %v368 = vld [vmem:[#allocation2 + $0x4c] sm:$0xf]
      %v369 = vld [vmem:[%s185] sm:$0xff]
      %v370 = vld [vmem:[%s185 + $0x8] sm:$0xff]
      %v371 = vld [vmem:[%s185 + $0x10] sm:$0xff]
      %v372 = vld [vmem:[%s185 + $0x18] sm:$0xff]
      %v373 = vld [vmem:[%s185 + $0x20] sm:$0xff]
      %v374 = vld [vmem:[%s185 + $0x28] sm:$0xff]
      %v375 = vld [vmem:[%s185 + $0x30] sm:$0xff]
      %v376 = vld [vmem:[%s185 + $0x38] sm:$0xff]
      %378 = vset.pattern.permute.xlu0 0
      %379 = vperm.xlu0 %378, %v369
      %v380 = vpop.permute.xlu0 %379
      %383 = vset.pattern.permute.xlu0 0
      %384 = vperm.xlu0 %383, %v370
      %v385 = vpop.permute.xlu0 %384
      %388 = vset.pattern.permute.xlu0 0
      %389 = vperm.xlu0 %388, %v371
      %v390 = vpop.permute.xlu0 %389
      %393 = vset.pattern.permute.xlu0 0
      %394 = vperm.xlu0 %393, %v372
      %v395 = vpop.permute.xlu0 %394
      %398 = vset.pattern.permute.xlu0 0
      %399 = vperm.xlu0 %398, %v373
      %v400 = vpop.permute.xlu0 %399
      %403 = vset.pattern.permute.xlu0 0
      %404 = vperm.xlu0 %403, %v374
      %v405 = vpop.permute.xlu0 %404
      %408 = vset.pattern.permute.xlu0 0
      %409 = vperm.xlu0 %408, %v375
      %v410 = vpop.permute.xlu0 %409
      %413 = vset.pattern.permute.xlu0 0
      %414 = vperm.xlu0 %413, %v376
      %v415 = vpop.permute.xlu0 %414
      %v425 = vunpack.c.l.b16 %v341
      %v426 = vunpack.c.h.b16 %v341
      %v427 = vunpack.c.l.b16 %v342
      %v428 = vunpack.c.h.b16 %v342
      %v429 = vunpack.c.l.b16 %v343
      %v430 = vunpack.c.h.b16 %v343
      %v431 = vunpack.c.l.b16 %v344
      %v432 = vunpack.c.h.b16 %v344
      %v433 = vunpack.c.l.b16 %v345
      %v434 = vunpack.c.h.b16 %v345
      %v435 = vunpack.c.l.b16 %v346
      %v436 = vunpack.c.h.b16 %v346
      %v437 = vunpack.c.l.b16 %v347
      %v438 = vunpack.c.h.b16 %v347
      %v439 = vunpack.c.l.b16 %v348
      %v440 = vunpack.c.h.b16 %v348
      %v441 = vpack.c.b16 %v427, %v425
      %v442 = vpack.c.b16 %v428, %v426
      %v443 = vpack.c.b16 %v431, %v429
      %v444 = vpack.c.b16 %v432, %v430
      %v445 = vpack.c.b16 %v435, %v433
      %v446 = vpack.c.b16 %v436, %v434
      %v447 = vpack.c.b16 %v439, %v437
      %v448 = vpack.c.b16 %v440, %v438
      %v473 = vunpack.c.l.b16 %v349
      %v474 = vunpack.c.l.b16 %v350
      %v475 = vunpack.c.l.b16 %v351
      %v476 = vunpack.c.l.b16 %v352
      %v477 = vunpack.c.l.b16 %v353
      %v478 = vunpack.c.l.b16 %v354
      %v479 = vunpack.c.l.b16 %v355
      %v480 = vunpack.c.l.b16 %v356
      %v481 = vunpack.c.l.b16 %v357
      %v482 = vunpack.c.l.b16 %v358
      %v483 = vunpack.c.l.b16 %v359
      %v484 = vunpack.c.l.b16 %v360
      %v485 = vunpack.c.l.b16 %v361
      %v486 = vunpack.c.l.b16 %v362
      %v487 = vunpack.c.l.b16 %v363
      %v488 = vunpack.c.l.b16 %v364
      %v489 = vunpack.c.l.b16 %v365
      %v490 = vunpack.c.l.b16 %v366
      %v491 = vunpack.c.l.b16 %v367
      %v492 = vunpack.c.l.b16 %v368
      %v493 = vpack.c.b16 %v474, %v473
      %v494 = vpack.c.b16 %v476, %v475
      %v495 = vpack.c.b16 %v478, %v477
      %v496 = vpack.c.b16 %v480, %v479
      %v497 = vpack.c.b16 %v482, %v481
      %v498 = vpack.c.b16 %v484, %v483
      %v499 = vpack.c.b16 %v486, %v485
      %v500 = vpack.c.b16 %v488, %v487
      %v501 = vpack.c.b16 %v490, %v489
      %v502 = vpack.c.b16 %v492, %v491
      %vm513 = vcmask 261120
      %v515 = vsel %vm513, %v442, 0
      %v518 = vsel %vm513, %v444, 0
      %v521 = vsel %vm513, %v446, 0
      %v524 = vsel %vm513, %v448, 0
      %526 = vmatpush.bf16.msra.mxu0 %v500
      %527 = vmatpush.bf16.msra.mxu0 %v499
      %528 = vmatpush.bf16.msra.mxu0 %v498
      %529 = vmatpush.bf16.msra.mxu0 %v497
      %530 = vmatpush.bf16.msra.mxu0 %v496
      %531 = vmatpush.bf16.msra.mxu0 %v495
      %532 = vmatpush.bf16.msra.mxu0 %v494
      %533 = vmatpush.bf16.msra.mxu0 %v493
      %534 = vmatmul.bf16.gmra.mxu0 %v441
      %v535 = vpop.f32.mrf.mxu0
      %v536 = vadd.f32 %v380, %v535
      %v537 = vpop.f32.mrf.mxu0
      %v538 = vadd.f32 %v385, %v537
      %539 = vmatmul.bf16.gmra.mxu0 %v443
      %v540 = vpop.f32.mrf.mxu0
      %v541 = vadd.f32 %v390, %v540
      %v542 = vpop.f32.mrf.mxu0
      %v543 = vadd.f32 %v395, %v542
      %544 = vmatmul.bf16.gmra.mxu0 %v445
      %v545 = vpop.f32.mrf.mxu0
      %v546 = vadd.f32 %v400, %v545
      %v547 = vpop.f32.mrf.mxu0
      %v548 = vadd.f32 %v405, %v547
      %549 = vmatmul.bf16.gmra.mxu0 %v447
      %v550 = vpop.f32.mrf.mxu0
      %v551 = vadd.f32 %v410, %v550
      %v552 = vpop.f32.mrf.mxu0
      %v553 = vadd.f32 %v415, %v552
      %554 = vdwg.mxu0
      %555 = vmatpush.bf16.msra.mxu0 0
      %556 = vmatpush.bf16.msra.mxu0 0
      %557 = vmatpush.bf16.msra.mxu0 0
      %558 = vmatpush.bf16.msra.mxu0 0
      %559 = vmatpush.bf16.msra.mxu0 0
      %560 = vmatpush.bf16.msra.mxu0 0
      %561 = vmatpush.bf16.msra.mxu0 %v502
      %562 = vmatpush.bf16.msra.mxu0 %v501
      %563 = vmatmul.bf16.gmra.mxu0 %v515
      %v564 = vpop.f32.mrf.mxu0
      %v565 = vadd.f32 %v536, %v564
      %v566 = vpop.f32.mrf.mxu0
      %v567 = vadd.f32 %v538, %v566
      %568 = vmatmul.bf16.gmra.mxu0 %v518
      %v569 = vpop.f32.mrf.mxu0
      %v570 = vadd.f32 %v541, %v569
      %v571 = vpop.f32.mrf.mxu0
      %v572 = vadd.f32 %v543, %v571
      %573 = vmatmul.bf16.gmra.mxu0 %v521
      %v574 = vpop.f32.mrf.mxu0
      %v575 = vadd.f32 %v546, %v574
      %v576 = vpop.f32.mrf.mxu0
      %v577 = vadd.f32 %v548, %v576
      %578 = vmatmul.bf16.gmra.mxu0 %v524
      %v579 = vpop.f32.mrf.mxu0
      %v580 = vadd.f32 %v551, %v579
      %v581 = vpop.f32.mrf.mxu0
      %v582 = vadd.f32 %v553, %v581
      %583 = vdwg.mxu0
      %v584 = vxor.u32 %v575, 2147483648
      %v585 = vxor.u32 %v577, 2147483648
      %v586 = vxor.u32 %v580, 2147483648
      %v587 = vxor.u32 %v582, 2147483648
      %v588 = vmul.f32 %v584, 1.442695
      %v589 = vpow.pop %v588
      %v590 = vmul.f32 %v585, 1.442695
      %v591 = vpow.pop %v590
      %v592 = vmul.f32 %v586, 1.442695
      %v593 = vpow.pop %v592
      %v594 = vmul.f32 %v587, 1.442695
      %v595 = vpow.pop %v594
      %v596 = vadd.f32 %v589, 1.0
      %v597 = vadd.f32 %v591, 1.0
      %v598 = vadd.f32 %v593, 1.0
      %v599 = vadd.f32 %v595, 1.0
      %v600 = vrcp.pop %v596
      %v601 = vmul.f32 %v596, %v600
      %v602 = vsub.f32 1.0, %v601
      %v603 = vmul.f32 %v600, %v602
      %v604 = vadd.f32 %v600, %v603
      %vm605 = vweird.f32 %v596
      %vm606 = vweird.f32 %v600
      %vm607 = vmor %vm605, %vm606
      %v608 = vsel %vm607, %v600, %v604
      %v609 = vand.u32 2147483647, %v596
      %vm610 = vcmp.eq.f32.partialorder %v609, 8.507059e+37
      %v611 = vand.u32 %v596, 2147483648
      %v612 = vor.u32 1.1754944e-38, %v611
      %v613 = vsel %vm610, %v612, %v608
      %v614 = vmul.f32 1.0, %v613
      %v615 = vrcp.pop %v597
      %v616 = vmul.f32 %v597, %v615
      %v617 = vsub.f32 1.0, %v616
      %v618 = vmul.f32 %v615, %v617
      %v619 = vadd.f32 %v615, %v618
      %vm620 = vweird.f32 %v597
      %vm621 = vweird.f32 %v615
      %vm622 = vmor %vm620, %vm621
      %v623 = vsel %vm622, %v615, %v619
      %v624 = vand.u32 2147483647, %v597
      %vm625 = vcmp.eq.f32.partialorder %v624, 8.507059e+37
      %v626 = vand.u32 %v597, 2147483648
      %v627 = vor.u32 1.1754944e-38, %v626
      %v628 = vsel %vm625, %v627, %v623
      %v629 = vmul.f32 1.0, %v628
      %v630 = vrcp.pop %v598
      %v631 = vmul.f32 %v598, %v630
      %v632 = vsub.f32 1.0, %v631
      %v633 = vmul.f32 %v630, %v632
      %v634 = vadd.f32 %v630, %v633
      %vm635 = vweird.f32 %v598
      %vm636 = vweird.f32 %v630
      %vm637 = vmor %vm635, %vm636
      %v638 = vsel %vm637, %v630, %v634
      %v639 = vand.u32 2147483647, %v598
      %vm640 = vcmp.eq.f32.partialorder %v639, 8.507059e+37
      %v641 = vand.u32 %v598, 2147483648
      %v642 = vor.u32 1.1754944e-38, %v641
      %v643 = vsel %vm640, %v642, %v638
      %v644 = vmul.f32 1.0, %v643
      %v645 = vrcp.pop %v599
      %v646 = vmul.f32 %v599, %v645
      %v647 = vsub.f32 1.0, %v646
      %v648 = vmul.f32 %v645, %v647
      %v649 = vadd.f32 %v645, %v648
      %vm650 = vweird.f32 %v599
      %vm651 = vweird.f32 %v645
      %vm652 = vmor %vm650, %vm651
      %v653 = vsel %vm652, %v645, %v649
      %v654 = vand.u32 2147483647, %v599
      %vm655 = vcmp.eq.f32.partialorder %v654, 8.507059e+37
      %v656 = vand.u32 %v599, 2147483648
      %v657 = vor.u32 1.1754944e-38, %v656
      %v658 = vsel %vm655, %v657, %v653
      %v659 = vmul.f32 1.0, %v658
      %v660 = vmul.f32 %v565, %v614
      %v661 = vmul.f32 %v567, %v629
      %v662 = vmul.f32 %v570, %v644
      %v663 = vmul.f32 %v572, %v659
      %v664 = vld [vmem:[%s180] sm:$0xff]
      %v665 = vld [vmem:[%s180 + $0x8] sm:$0xff]
      %v666 = vld [vmem:[%s180 + $0x10] sm:$0xff]
      %v667 = vld [vmem:[%s180 + $0x18] sm:$0xff]
      %v668 = vadd.f32 %v660, %v664
      %v669 = vadd.f32 %v661, %v665
      %v670 = vadd.f32 %v662, %v666
      %v671 = vadd.f32 %v663, %v667
      %v672 = vmul.f32 %v668, 0.70710677
      %v673 = vmul.f32 %v669, 0.70710677
      %v674 = vmul.f32 %v670, 0.70710677
      %v675 = vmul.f32 %v671, 0.70710677
      %vm676 = vcmask 130048
      %677 = vst.msk [vmem:[%s190] sm:$0xff] %vm676, %v672
      %678 = vst.msk [vmem:[%s190 + $0x8] sm:$0xff] %vm676, %v673
      %679 = vst.msk [vmem:[%s190 + $0x10] sm:$0xff] %vm676, %v674
      %680 = vst.msk [vmem:[%s190 + $0x18] sm:$0xff] %vm676, %v675
      %p681 = scmp.lt.s32.totalorder %s14, 1
      %s682 = scalar_select %p681, %s14, 1
      %s683 = smul.addr %s682, 4
      %s684 = smul.addr %s683, 8
      %s685 = scalar_lea.vmem %s3, %s684
      // Predicated region
      $region33: #{tpu_custom_call.1} parent=31 // pred_check
        %p686 = pneg %p105
      $region34: #{tpu_custom_call.1} parent=31 // pred_check_branch
        %688 = sbr.rel (%p686) target = $region36
      $region35: #{tpu_custom_call.1} parent=31 // pred_region
        _
      $region36: #{tpu_custom_call.1} parent=31 // pred_fallthru
        _
    $region32: #{tpu_custom_call.1} parent=5 // pred_fallthru
      _
    %p689 = scmp.le.s32.totalorder 2, %s9
    // Predicated region
    $region37: #{tpu_custom_call.1} parent=5 // pred_check
      %p690 = pneg %p689
    $region38: #{tpu_custom_call.1} parent=5 // pred_check_branch
      %692 = sbr.rel (%p690) target = $region40
    $region39: #{tpu_custom_call.1} parent=5 // pred_region
      %s693 = ssub.s32 %s9, 2
      // Predicated region
      $region41: #{tpu_custom_call.1} parent=39 // pred_check
        %p694 = pneg %p111
      $region42: #{tpu_custom_call.1} parent=39 // pred_check_branch
        %696 = sbr.rel (%p694) target = $region44
      $region43: #{tpu_custom_call.1} parent=39 // pred_region
        %p697 = scmp.lt.s32.totalorder %s15, 1
        %s698 = scalar_select %p697, %s15, 1
        %s699 = smul.addr %s698, 4
        %s700 = smul.addr %s699, 8
        %s701 = scalar_lea.vmem %s3, %s700
      $region44: #{tpu_custom_call.1} parent=39 // pred_fallthru
        _
    $region40: #{tpu_custom_call.1} parent=5 // pred_fallthru
      _
  $region6: #{tpu_custom_call.1} parent=0 // loop_footer
    %s13 = sadd.s32 1, %s9
  $region7: #{tpu_custom_call.1} parent=0 // loop_footer_branch
    %8 = sbr.rel target = $region3
  $region8: #{tpu_custom_call.1} parent=0 // loop_exit
    _

</llo_original>
